<compile_context>
chip_gen: v6e
topology: v6e:2x2x1
jax: 0.10.0
libtpu: 0.0.40
codegen_flags: <defaults>
</compile_context>

<pallas_src>
import math

import jax
import jax.numpy as jnp
from jax import lax
from jax.experimental import pallas as pl
from jax.experimental.pallas import tpu as pltpu


def _make_kernel(C1, H, W, use_slab):
    HW = H * W
    taps = [(dy, dx) for dy in (-1, 0, 1) for dx in (-1, 0, 1)]  # (ky,kx) row-major

    def kernel(col_ref, x_ref, w_ref, b_ref, o_ref):
        # col_ref: (1, HW) int32    column (w) coordinate of every flattened pixel
        # x_ref  : (C1, HW)         one image, channels on sublanes, flat HW on lanes
        # w_ref  : (C2t, 9*C1) [slab path]  or  (9, C2t, C1) [per-tap path]
        # b_ref  : (C2t, 1) f32     fused bias
        # o_ref  : (C2t, HW)
        x = x_ref[...]                                        # keep input dtype (bf16/f32)
        idx = lax.broadcasted_iota(jnp.int32, (1, HW), 1)     # flat pixel index
        col = col_ref[...]                                    # pixel column index

        def window(dy, dx):
            """x rotated so lane i holds pixel (h+dy, w+dx); out-of-image lanes -> 0."""
            off = dy * W + dx
            win = x if off == 0 else pltpu.roll(x, shift=(-off) % HW, axis=1)
            conds = []
            if dy == -1:
                conds.append(idx >= W)              # h - 1 >= 0
            elif dy == 1:
                conds.append(idx < (H - 1) * W)     # h + 1 <= H - 1
            if dx == -1:
                conds.append(col >= 1)              # w - 1 >= 0
            elif dx == 1:
                conds.append(col <= W - 2)          # w + 1 <= W - 1
            if conds:
                valid = conds[0]
                for c in conds[1:]:
                    valid = jnp.logical_and(valid, c)
                win = jnp.where(valid, win, 0)      # select: dtype-preserving, no mul
            return win

        if use_slab:
            # Small C1: one MXU matmul with contraction depth 9*C1.
            slab = jnp.concatenate([window(dy, dx) for dy, dx in taps], axis=0)
            acc = jnp.dot(w_ref[...], slab, preferred_element_type=jnp.float32)
        else:
            # Large C1: accumulate 9 per-tap matmuls; never materialize the 9x slab.
            acc = None
            for t, (dy, dx) in enumerate(taps):
                part = jnp.dot(w_ref[t], window(dy, dx),
                               preferred_element_type=jnp.float32)
                acc = part if acc is None else acc + part

        z = acc + b_ref[...]                                  # f32, (C2t,1) bias broadcast
        o_ref[...] = (z * jax.nn.sigmoid(z)).astype(o_ref.dtype)   # SiLU

    return kernel


def repconv_forward(x, w3, w1, bn1, bn2, eps=1e-5, groups=1, c2_block=256):
    """RepConv forward (training-form, bn=False).

    x  : (N, C1, H, W)
    w3 : (C2, C1, 3, 3)  conv1 weight (bias=False)
    w1 : (C2, C1, 1, 1)  conv2 weight (bias=False)
    bn1, bn2 : tuples (gamma, beta, running_mean, running_var), each (C2,)
    """
    if groups != 1:
        raise NotImplementedError("TODO(synk): grouped RepConv (g>1) not implemented")

    N, C1, H, W = x.shape
    C2 = w3.shape[0]
    HW = H * W

    # ---- Fold BatchNorm (eval) into each conv, then fold the 1x1 into the 3x3
    # center tap (exactly RepConv.get_equivalent_kernel_bias with bn=False). ----
    g1, b1, m1, v1 = (a.astype(jnp.float32) for a in bn1)
    g2, b2, m2, v2 = (a.astype(jnp.float32) for a in bn2)
    t1 = g1 / jnp.sqrt(v1 + eps)
    t2 = g2 / jnp.sqrt(v2 + eps)
    w3f = w3.astype(jnp.float32) * t1[:, None, None, None]
    w1f = w1.astype(jnp.float32) * t2[:, None, None, None]
    bias = (b1 - m1 * t1) + (b2 - m2 * t2)                       # (C2,)
    weq = w3f.at[:, :, 1, 1].add(w1f[:, :, 0, 0])                # (C2, C1, 3, 3)

    # MXU operands live in the input dtype (bf16 in => bf16 matmuls).
    mxu_dtype = x.dtype
    isz = jnp.dtype(mxu_dtype).itemsize

    # Static strategy: slab matmul only when the slab is small, else per-tap.
    use_slab = (C1 <= 64) and (9 * C1 * HW * isz <= (8 << 20))

    c2_t = C2 if C2 <= c2_block else c2_block                    # mult of 8 or full
    n_c2 = pl.cdiv(C2, c2_t)

    if use_slab:
        # K ordered (ky, kx, c1) to match the in-kernel window concatenation.
        w_all = jnp.transpose(weq, (0, 2, 3, 1)).reshape(C2, 9 * C1).astype(mxu_dtype)
        w_spec = pl.BlockSpec((c2_t, 9 * C1), lambda n, c: (c, 0))
    else:
        # (tap, c2, c1) layout; kernel slices one (C2t, C1) tap at a time.
        w_all = jnp.transpose(weq, (2, 3, 0, 1)).reshape(9, C2, C1).astype(mxu_dtype)
        w_spec = pl.BlockSpec((9, c2_t, C1), lambda n, c: (0, c, 0))

    bias2d = bias.reshape(C2, 1).astype(jnp.float32)
    col_ids = (jnp.arange(HW, dtype=jnp.int32) % W).reshape(1, HW)

    x_flat = x.reshape(N, C1, HW)                                # free reshape (contiguous)
    kernel = _make_kernel(C1, H, W, use_slab)

    # ---- Scoped-VMEM budget sized from the per-step working set. ----
    osz = jnp.dtype(x.dtype).itemsize
    work = 2 * C1 * HW * isz                      # x block (double-buffered)
    work += 2 * c2_t * HW * osz                   # output block (double-buffered)
    work += 2 * int(w_all.size) * isz + 2 * C2 * 4
    work += c2_t * HW * 4                         # f32 pre-activation / accumulator
    if use_slab:
        work += 2 * 9 * C1 * HW * isz             # slab + live window temporaries
    else:
        work += 3 * C1 * HW * isz                 # a few live rolled windows
    vmem_limit = int(min(max(int(work * 1.5), 32 << 20), 64 << 20))

    out = pl.pallas_call(
        kernel,
        out_shape=jax.ShapeDtypeStruct((N, C2, HW), x.dtype),
        grid=(N, n_c2),
        in_specs=[
            pl.BlockSpec((1, HW), lambda n, c: (0, 0)),              # column indices
            pl.BlockSpec((None, C1, HW), lambda n, c: (n, 0, 0)),    # x, resident over c
            w_spec,                                                  # fused weights
            pl.BlockSpec((c2_t, 1), lambda n, c: (c, 0)),            # fused bias
        ],
        out_specs=pl.BlockSpec((None, c2_t, HW), lambda n, c: (n, c, 0)),
        compiler_params=pltpu.CompilerParams(
            dimension_semantics=("parallel", "parallel"),            # megacore sharding
            vmem_limit_bytes=vmem_limit,
        ),
    )(col_ids, x_flat, w_all, bias2d)

    return out.reshape(N, C2, H, W)


def repconv_ref(x, w3, w1, bn1, bn2, eps=1e-5):
    """Pure-JAX reference mirroring the unfused PyTorch RepConv.forward (bn=False)."""
    def bn(y, p):
        g, b, m, v = (a.reshape(1, -1, 1, 1).astype(jnp.float32) for a in p)
        return (y - m) / jnp.sqrt(v + eps) * g + b

    dn = ("NCHW", "OIHW", "NCHW")
    xf = x.astype(jnp.float32)
    y1 = lax.conv_general_dilated(xf, w3, (1, 1), ((1, 1), (1, 1)),
                                  dimension_numbers=dn,
                                  precision=lax.Precision.HIGHEST)
    y2 = lax.conv_general_dilated(xf, w1, (1, 1), ((0, 0), (0, 0)),
                                  dimension_numbers=dn,
                                  precision=lax.Precision.HIGHEST)
    z = bn(y1, bn1) + bn(y2, bn2)          # identity BN branch absent (bn=False)
    return z * jax.nn.sigmoid(z)           # SiLU


def _make_params(key, C1, C2):
    ks = jax.random.split(key, 10)
    bound3 = 1.0 / math.sqrt(C1 * 9)
    bound1 = 1.0 / math.sqrt(C1)
    w3 = jax.random.uniform(ks[0], (C2, C1, 3, 3), jnp.float32, -bound3, bound3)
    w1 = jax.random.uniform(ks[1], (C2, C1, 1, 1), jnp.float32, -bound1, bound1)
    bn1 = (jax.random.uniform(ks[2], (C2,), jnp.float32, 0.5, 1.5),   # gamma
           0.1 * jax.random.normal(ks[3], (C2,), jnp.float32),        # beta
           0.1 * jax.random.normal(ks[4], (C2,), jnp.float32),        # running_mean
           jax.random.uniform(ks[5], (C2,), jnp.float32, 0.5, 1.5))   # running_var
    bn2 = (jax.random.uniform(ks[6], (C2,), jnp.float32, 0.5, 1.5),
           0.1 * jax.random.normal(ks[7], (C2,), jnp.float32),
           0.1 * jax.random.normal(ks[8], (C2,), jnp.float32),
           jax.random.uniform(ks[9], (C2,), jnp.float32, 0.5, 1.5))
    return w3, w1, bn1, bn2


if __name__ == "__main__":
    key = jax.random.PRNGKey(0)
    k_x1, k_p1, k_x2, k_p2 = jax.random.split(key, 4)

    # --- Test 1: small C1 (slab path), f32 I/O ---
    N, C1, C2, H, W = 2, 8, 16, 16, 16
    x = jax.random.normal(k_x1, (N, C1, H, W), dtype=jnp.float32)
    w3, w1, bn1, bn2 = _make_params(k_p1, C1, C2)
    out = jax.block_until_ready(repconv_forward(x, w3, w1, bn1, bn2))
    ref = repconv_ref(x, w3, w1, bn1, bn2)
    assert out.shape == (N, C2, H, W) and out.dtype == x.dtype
    assert jnp.allclose(out, ref, rtol=2e-3, atol=2e-3), "f32/slab path mismatch"

    # --- Test 2: large C1 (per-tap path), bf16 I/O (bf16 MXU operands) ---
    N2, C12, C22 = 1, 128, 64
    x2 = jax.random.normal(k_x2, (N2, C12, H, W), dtype=jnp.float32).astype(jnp.bfloat16)
    w3b, w1b, bn1b, bn2b = _make_params(k_p2, C12, C22)
    out2 = jax.block_until_ready(repconv_forward(x2, w3b, w1b, bn1b, bn2b))
    ref2 = repconv_ref(x2, w3b, w1b, bn1b, bn2b)
    assert out2.shape == (N2, C22, H, W) and out2.dtype == jnp.bfloat16
    assert jnp.allclose(out2.astype(jnp.float32), ref2, rtol=3e-2, atol=3e-2), \
        "bf16/per-tap path mismatch"

    print("KERNEL_OK")
</pallas_src>

<mosaic_0001>
module attributes {stable_mosaic.version = 11 : i64} {
  func.func @kernel(%arg0: i32, %arg1: i32, %arg2: memref<1x256xi32, #tpu.memory_space<vmem>>, %arg3: memref<1x8x256xf32, #tpu.memory_space<vmem>>, %arg4: memref<16x72xf32, #tpu.memory_space<vmem>>, %arg5: memref<16x1xf32, #tpu.memory_space<vmem>>, %arg6: memref<1x16x256xf32, #tpu.memory_space<vmem>>) attributes {dimension_semantics = [#tpu.dimension_semantics<parallel>, #tpu.dimension_semantics<parallel>], iteration_bounds = array<i64: 2, 1>, scalar_prefetch = 0 : i64, scratch_operands = 0 : i64, tpu.core_type = #tpu.core_type<tc>, window_params = [{pipeline_mode = #tpu.pipeline_mode<synchronous>, transform_indices = @transform_0, window_bounds = array<i64: 1, 256>}, {transform_indices = @transform_1, window_bounds = array<i64: 1, 8, 256>}, {transform_indices = @transform_2, window_bounds = array<i64: 16, 72>}, {transform_indices = @transform_3, window_bounds = array<i64: 16, 1>}, {transform_indices = @transform_4, window_bounds = array<i64: 1, 16, 256>}]} {
    %c0 = arith.constant 0 : index
    %c0_0 = arith.constant 0 : index
    %c0_1 = arith.constant 0 : index
    %0 = vector.load %arg3[%c0, %c0_0, %c0_1] : memref<1x8x256xf32, #tpu.memory_space<vmem>>, vector<1x8x256xf32>
    %1 = vector.shape_cast %0 : vector<1x8x256xf32> to vector<8x256xf32>
    %2 = tpu.iota {dimensions = array<i32: 1>} : vector<1x256xi32>
    %c0_2 = arith.constant 0 : index
    %c0_3 = arith.constant 0 : index
    %3 = vector.load %arg2[%c0_2, %c0_3] : memref<1x256xi32, #tpu.memory_space<vmem>>, vector<1x256xi32>
    %c17_i32 = arith.constant 17 : i32
    %4 = tpu.dynamic_rotate %1 by %c17_i32 dim 1 : vector<8x256xf32>, i32 -> vector<8x256xf32>
    %c16_i32 = arith.constant 16 : i32
    %5 = vector.broadcast %c16_i32 : i32 to vector<1x256xi32>
    %6 = arith.cmpi sge, %2, %5 : vector<1x256xi32>
    %c1_i32 = arith.constant 1 : i32
    %7 = vector.broadcast %c1_i32 : i32 to vector<1x256xi32>
    %8 = arith.cmpi sge, %3, %7 : vector<1x256xi32>
    %9 = arith.andi %6, %8 : vector<1x256xi1>
    %c0_i32 = arith.constant 0 : i32
    %10 = arith.sitofp %c0_i32 : i32 to f32
    %11 = vector.shape_cast %9 : vector<1x256xi1> to vector<1x256xi1>
    %12 = vector.broadcast %11 : vector<1x256xi1> to vector<8x256xi1>
    %13 = vector.broadcast %10 : f32 to vector<8x256xf32>
    %14 = arith.select %12, %4, %13 : vector<8x256xi1>, vector<8x256xf32>
    %c16_i32_4 = arith.constant 16 : i32
    %15 = tpu.dynamic_rotate %1 by %c16_i32_4 dim 1 : vector<8x256xf32>, i32 -> vector<8x256xf32>
    %c16_i32_5 = arith.constant 16 : i32
    %16 = vector.broadcast %c16_i32_5 : i32 to vector<1x256xi32>
    %17 = arith.cmpi sge, %2, %16 : vector<1x256xi32>
    %c0_i32_6 = arith.constant 0 : i32
    %18 = arith.sitofp %c0_i32_6 : i32 to f32
    %19 = vector.shape_cast %17 : vector<1x256xi1> to vector<1x256xi1>
    %20 = vector.broadcast %19 : vector<1x256xi1> to vector<8x256xi1>
    %21 = vector.broadcast %18 : f32 to vector<8x256xf32>
    %22 = arith.select %20, %15, %21 : vector<8x256xi1>, vector<8x256xf32>
    %c15_i32 = arith.constant 15 : i32
    %23 = tpu.dynamic_rotate %1 by %c15_i32 dim 1 : vector<8x256xf32>, i32 -> vector<8x256xf32>
    %c16_i32_7 = arith.constant 16 : i32
    %24 = vector.broadcast %c16_i32_7 : i32 to vector<1x256xi32>
    %25 = arith.cmpi sge, %2, %24 : vector<1x256xi32>
    %c14_i32 = arith.constant 14 : i32
    %26 = vector.broadcast %c14_i32 : i32 to vector<1x256xi32>
    %27 = arith.cmpi sle, %3, %26 : vector<1x256xi32>
    %28 = arith.andi %25, %27 : vector<1x256xi1>
    %c0_i32_8 = arith.constant 0 : i32
    %29 = arith.sitofp %c0_i32_8 : i32 to f32
    %30 = vector.shape_cast %28 : vector<1x256xi1> to vector<1x256xi1>
    %31 = vector.broadcast %30 : vector<1x256xi1> to vector<8x256xi1>
    %32 = vector.broadcast %29 : f32 to vector<8x256xf32>
    %33 = arith.select %31, %23, %32 : vector<8x256xi1>, vector<8x256xf32>
    %c1_i32_9 = arith.constant 1 : i32
    %34 = tpu.dynamic_rotate %1 by %c1_i32_9 dim 1 : vector<8x256xf32>, i32 -> vector<8x256xf32>
    %c1_i32_10 = arith.constant 1 : i32
    %35 = vector.broadcast %c1_i32_10 : i32 to vector<1x256xi32>
    %36 = arith.cmpi sge, %3, %35 : vector<1x256xi32>
    %c0_i32_11 = arith.constant 0 : i32
    %37 = arith.sitofp %c0_i32_11 : i32 to f32
    %38 = vector.shape_cast %36 : vector<1x256xi1> to vector<1x256xi1>
    %39 = vector.broadcast %38 : vector<1x256xi1> to vector<8x256xi1>
    %40 = vector.broadcast %37 : f32 to vector<8x256xf32>
    %41 = arith.select %39, %34, %40 : vector<8x256xi1>, vector<8x256xf32>
    %c255_i32 = arith.constant 255 : i32
    %42 = tpu.dynamic_rotate %1 by %c255_i32 dim 1 : vector<8x256xf32>, i32 -> vector<8x256xf32>
    %c14_i32_12 = arith.constant 14 : i32
    %43 = vector.broadcast %c14_i32_12 : i32 to vector<1x256xi32>
    %44 = arith.cmpi sle, %3, %43 : vector<1x256xi32>
    %c0_i32_13 = arith.constant 0 : i32
    %45 = arith.sitofp %c0_i32_13 : i32 to f32
    %46 = vector.shape_cast %44 : vector<1x256xi1> to vector<1x256xi1>
    %47 = vector.broadcast %46 : vector<1x256xi1> to vector<8x256xi1>
    %48 = vector.broadcast %45 : f32 to vector<8x256xf32>
    %49 = arith.select %47, %42, %48 : vector<8x256xi1>, vector<8x256xf32>
    %c241_i32 = arith.constant 241 : i32
    %50 = tpu.dynamic_rotate %1 by %c241_i32 dim 1 : vector<8x256xf32>, i32 -> vector<8x256xf32>
    %c240_i32 = arith.constant 240 : i32
    %51 = vector.broadcast %c240_i32 : i32 to vector<1x256xi32>
    %52 = arith.cmpi slt, %2, %51 : vector<1x256xi32>
    %c1_i32_14 = arith.constant 1 : i32
    %53 = vector.broadcast %c1_i32_14 : i32 to vector<1x256xi32>
    %54 = arith.cmpi sge, %3, %53 : vector<1x256xi32>
    %55 = arith.andi %52, %54 : vector<1x256xi1>
    %c0_i32_15 = arith.constant 0 : i32
    %56 = arith.sitofp %c0_i32_15 : i32 to f32
    %57 = vector.shape_cast %55 : vector<1x256xi1> to vector<1x256xi1>
    %58 = vector.broadcast %57 : vector<1x256xi1> to vector<8x256xi1>
    %59 = vector.broadcast %56 : f32 to vector<8x256xf32>
    %60 = arith.select %58, %50, %59 : vector<8x256xi1>, vector<8x256xf32>
    %c240_i32_16 = arith.constant 240 : i32
    %61 = tpu.dynamic_rotate %1 by %c240_i32_16 dim 1 : vector<8x256xf32>, i32 -> vector<8x256xf32>
    %c240_i32_17 = arith.constant 240 : i32
    %62 = vector.broadcast %c240_i32_17 : i32 to vector<1x256xi32>
    %63 = arith.cmpi slt, %2, %62 : vector<1x256xi32>
    %c0_i32_18 = arith.constant 0 : i32
    %64 = arith.sitofp %c0_i32_18 : i32 to f32
    %65 = vector.shape_cast %63 : vector<1x256xi1> to vector<1x256xi1>
    %66 = vector.broadcast %65 : vector<1x256xi1> to vector<8x256xi1>
    %67 = vector.broadcast %64 : f32 to vector<8x256xf32>
    %68 = arith.select %66, %61, %67 : vector<8x256xi1>, vector<8x256xf32>
    %c239_i32 = arith.constant 239 : i32
    %69 = tpu.dynamic_rotate %1 by %c239_i32 dim 1 : vector<8x256xf32>, i32 -> vector<8x256xf32>
    %c240_i32_19 = arith.constant 240 : i32
    %70 = vector.broadcast %c240_i32_19 : i32 to vector<1x256xi32>
    %71 = arith.cmpi slt, %2, %70 : vector<1x256xi32>
    %c14_i32_20 = arith.constant 14 : i32
    %72 = vector.broadcast %c14_i32_20 : i32 to vector<1x256xi32>
    %73 = arith.cmpi sle, %3, %72 : vector<1x256xi32>
    %74 = arith.andi %71, %73 : vector<1x256xi1>
    %c0_i32_21 = arith.constant 0 : i32
    %75 = arith.sitofp %c0_i32_21 : i32 to f32
    %76 = vector.shape_cast %74 : vector<1x256xi1> to vector<1x256xi1>
    %77 = vector.broadcast %76 : vector<1x256xi1> to vector<8x256xi1>
    %78 = vector.broadcast %75 : f32 to vector<8x256xf32>
    %79 = arith.select %77, %69, %78 : vector<8x256xi1>, vector<8x256xf32>
    %80 = tpu.concatenate %14, %22, %33, %41, %1, %49, %60, %68, %79 in 0 : vector<8x256xf32>, vector<8x256xf32>, vector<8x256xf32>, vector<8x256xf32>, vector<8x256xf32>, vector<8x256xf32>, vector<8x256xf32>, vector<8x256xf32>, vector<8x256xf32> -> vector<72x256xf32>
    %c0_22 = arith.constant 0 : index
    %c0_23 = arith.constant 0 : index
    %81 = vector.load %arg4[%c0_22, %c0_23] : memref<16x72xf32, #tpu.memory_space<vmem>>, vector<16x72xf32>
    %cst = arith.constant dense<0.000000e+00> : vector<16x256xf32>
    %82 = tpu.matmul %81, %80, %cst {dimension_numbers = #tpu.dot_dimension_numbers<[1], [0], [0], [1], [0, 0, 1, 1], [], []>} : vector<16x72xf32>, vector<72x256xf32>, vector<16x256xf32> -> vector<16x256xf32>
    %c0_24 = arith.constant 0 : index
    %c0_25 = arith.constant 0 : index
    %83 = vector.load %arg5[%c0_24, %c0_25] : memref<16x1xf32, #tpu.memory_space<vmem>>, vector<16x1xf32>
    %84 = vector.broadcast %83 : vector<16x1xf32> to vector<16x256xf32>
    %85 = arith.addf %82, %84 : vector<16x256xf32>
    %86 = arith.negf %85 : vector<16x256xf32>
    %87 = math.exp %86 : vector<16x256xf32>
    %cst_26 = arith.constant 1.000000e+00 : f32
    %88 = vector.broadcast %cst_26 : f32 to vector<16x256xf32>
    %89 = arith.addf %88, %87 : vector<16x256xf32>
    %90 = arith.divf %88, %89 : vector<16x256xf32>
    %91 = arith.mulf %85, %90 : vector<16x256xf32>
    %c0_27 = arith.constant 0 : index
    %c0_28 = arith.constant 0 : index
    %c0_29 = arith.constant 0 : index
    %92 = vector.load %arg6[%c0_27, %c0_28, %c0_29] : memref<1x16x256xf32, #tpu.memory_space<vmem>>, vector<1x16x256xf32>
    %93 = vector.shape_cast %92 : vector<1x16x256xf32> to vector<16x256xf32>
    %94 = vector.shape_cast %91 : vector<16x256xf32> to vector<1x16x256xf32>
    tpu.vector_store %arg6[%c0_27, %c0_28, %c0_29], %94 {strides = array<i32>} : memref<1x16x256xf32, #tpu.memory_space<vmem>>, vector<1x16x256xf32>,
    return
  }
  func.func @transform_0(%arg0: i32, %arg1: i32) -> (i32, i32) {
    %c0_i32 = arith.constant 0 : i32
    %c0_i32_0 = arith.constant 0 : i32
    %c0_i32_1 = arith.constant 0 : i32
    return %c0_i32, %c0_i32_0 : i32, i32
  }
  func.func @transform_1(%arg0: i32, %arg1: i32) -> (i32, i32, i32) {
    %c0_i32 = arith.constant 0 : i32
    %c0_i32_0 = arith.constant 0 : i32
    %c0_i32_1 = arith.constant 0 : i32
    return %arg0, %c0_i32, %c0_i32_0 : i32, i32, i32
  }
  func.func @transform_2(%arg0: i32, %arg1: i32) -> (i32, i32) {
    %c0_i32 = arith.constant 0 : i32
    %c0_i32_0 = arith.constant 0 : i32
    return %arg1, %c0_i32 : i32, i32
  }
  func.func @transform_3(%arg0: i32, %arg1: i32) -> (i32, i32) {
    %c0_i32 = arith.constant 0 : i32
    %c0_i32_0 = arith.constant 0 : i32
    return %arg1, %c0_i32 : i32, i32
  }
  func.func @transform_4(%arg0: i32, %arg1: i32) -> (i32, i32, i32) {
    %c0_i32 = arith.constant 0 : i32
    %c0_i32_0 = arith.constant 0 : i32
    return %arg0, %arg1, %c0_i32 : i32, i32, i32
  }
}

</mosaic_0001>

<llo_original>
// kernel: tpu_custom_call.1
$region0: #{tpu_custom_call.1}
  #allocation0 [shape = 'u32[]', space=smem, size = 0x4, offset = 0x4, fixed_abs, tag = 'smem constant byte address 0x4 - core index']
  #allocation1 [shape = 'u32[144,128]{1,0:T(1,128)}', space=vmem, size = 0x12000, scoped, tag = 'internal scratch']
  %s0 = inlined_call_operand.vmem [shape: s32[1,256], index: 0, kind: input, shape index: {}]
  %s1 = inlined_call_operand.hbm [shape: f32[2,8,256], index: 1, kind: input, shape index: {}]
  %s2 = inlined_call_operand.vmem [shape: f32[16,72], index: 2, kind: input, shape index: {}]
  %s3 = inlined_call_operand.vmem [shape: f32[16,1], index: 3, kind: input, shape index: {}]
  %s4 = inlined_call_operand.hbm [shape: f32[2,16,256], index: 4, kind: output, shape index: {}]
  %s5 = sld [smem:[#allocation0]]
  $region53: #{tpu_custom_call.1} parent=0
    _
  %s7 = ssub.s32 1, %s5
  %s8 = scalar_select 0, %s7, %s5
  $region1: #{tpu_custom_call.1} parent=0
    #allocation2 [shape = 'u8[16384]{0}', space=vmem, size = 0x4000, scoped, tag = 'input window, operand 1']
    #allocation3 [shape = 's32[2]{0}', space=sflag, size = 0x8, scoped, tag = 'scoped memory for tpu_custom_call.1']
    #allocation4 [shape = 's32[2]{0}', space=sflag, size = 0x8, scoped, tag = 'scoped memory for tpu_custom_call.1']
    #allocation5 [shape = 'u8[32768]{0}', space=vmem, size = 0x8000, scoped, tag = 'output window, operand 0']
    %9 = vsyncpa [#allocation3], 0
    %s10 = scalar_lea.sflag [#allocation3], 1
    %11 = vsyncpa %s10, 0
    %12 = vsyncpa [#allocation4], 0
    %s13 = scalar_lea.sflag [#allocation4], 1
    %14 = vsyncpa %s13, 0
    loop: start=0, step=1, limit=4
    $region2: #{tpu_custom_call.1} parent=1 // loop_pre_header
      _
    $region3: #{tpu_custom_call.1} parent=1 // loop_header
      %s16 = sphi 0, %s20
      %p17 = scmp.ge.s32.totalorder %s16, 4
      %s23 = sphi 0, %s35
      %s24 = sphi 0, %s31
      %s25 = sphi 0, %s23
      %s26 = sphi 0, %s24
      %s27 = sphi 0, %s25
      %s28 = sphi 0, %s26
      %s36 = sphi 0, %s36
      %s38 = sphi 0, %s36
      %s39 = sphi 0, %s38
      %s53 = sphi 0, %s39
      %s59 = sphi 0, %s61
      %s62 = sphi 0, %s59
      %s63 = sphi 0, %s62
      %s79 = sphi 0, %s63
      %s85 = sphi 0, %s87
      %s88 = sphi 0, %s85
      %s89 = sphi 0, %s88
      %s105 = sphi 0, %s89
      %s111 = sphi 0, %s113
      %s114 = sphi 0, %s111
      %s115 = sphi 0, %s114
      %s131 = sphi 0, %s115
      %s139 = sphi 0, %s141
      %s142 = sphi 0, %s139
      %s143 = sphi 0, %s142
      %s159 = sphi 0, %s143
    $region4: #{tpu_custom_call.1} parent=1 // loop_header_branch
      %19 = sbr.rel (%p17) target = $region8
    $region5: #{tpu_custom_call.1} parent=1 // loop_body
      %s21 = ssub.s32 %s16, 1
      %s22 = ssub.s32 %s16, 2
      %s29 = sadd.s32 1, %s24
      %p30 = scmp.ge.s32.totalorder %s29, 1
      %s31 = scalar_select %p30, 0, %s29
      %s32 = sadd.s32 1, %s23
      %s33 = scalar_select %p30, %s32, %s23
      %p34 = scmp.ge.s32.totalorder %s33, 2
      %s35 = scalar_select %p34, 0, %s33
      %s37 = sadd.s32 %s36, 1
      %p40 = scmp.eq.s32.totalorder %s16, 1
      %p41 = scmp.ne.s32.totalorder %s36, %s38
      %p42 = scmp.eq.s32.totalorder %s16, 0
      %p43 = por %p41, %p42
      %p44 = scmp.ne.s32.totalorder %s36, %s38
      %p45 = scmp.eq.s32.totalorder %s21, 1
      %p46 = por %p44, %p45
      %p47 = scmp.ne.s32.totalorder %s38, %s39
      %p48 = scmp.eq.s32.totalorder %s21, 0
      %p49 = por %p47, %p48
      %p50 = scmp.ne.s32.totalorder %s38, %s39
      %p51 = scmp.eq.s32.totalorder %s22, 1
      %p52 = por %p50, %p51
      %p54 = scmp.ne.s32.totalorder %s39, %s53
      %p55 = scmp.eq.s32.totalorder %s22, 0
      %p56 = por %p54, %p55
      %s57 = ssub.s32 %s23, %s35
      %p58 = scmp.eq.s32.totalorder %s57, 0
      %s60 = sadd.s32 %s59, 1
      %s61 = scalar_select %p58, %s59, %s60
      %p64 = pneg %p58
      %p65 = scmp.eq.s32.totalorder %s16, 1
      %p66 = por %p64, %p65
      %p67 = scmp.ne.s32.totalorder %s59, %s62
      %p68 = scmp.eq.s32.totalorder %s16, 0
      %p69 = por %p67, %p68
      %p70 = scmp.ne.s32.totalorder %s59, %s62
      %p71 = scmp.eq.s32.totalorder %s21, 1
      %p72 = por %p70, %p71
      %p73 = scmp.ne.s32.totalorder %s62, %s63
      %p74 = scmp.eq.s32.totalorder %s21, 0
      %p75 = por %p73, %p74
      %p76 = scmp.ne.s32.totalorder %s62, %s63
      %p77 = scmp.eq.s32.totalorder %s22, 1
      %p78 = por %p76, %p77
      %p80 = scmp.ne.s32.totalorder %s63, %s79
      %p81 = scmp.eq.s32.totalorder %s22, 0
      %p82 = por %p80, %p81
      %s83 = ssub.s32 %s24, %s31
      %p84 = scmp.eq.s32.totalorder %s83, 0
      %s86 = sadd.s32 %s85, 1
      %s87 = scalar_select %p84, %s85, %s86
      %p90 = pneg %p84
      %p91 = scmp.eq.s32.totalorder %s16, 1
      %p92 = por %p90, %p91
      %p93 = scmp.ne.s32.totalorder %s85, %s88
      %p94 = scmp.eq.s32.totalorder %s16, 0
      %p95 = por %p93, %p94
      %p96 = scmp.ne.s32.totalorder %s85, %s88
      %p97 = scmp.eq.s32.totalorder %s21, 1
      %p98 = por %p96, %p97
      %p99 = scmp.ne.s32.totalorder %s88, %s89
      %p100 = scmp.eq.s32.totalorder %s21, 0
      %p101 = por %p99, %p100
      %p102 = scmp.ne.s32.totalorder %s88, %s89
      %p103 = scmp.eq.s32.totalorder %s22, 1
      %p104 = por %p102, %p103
      %p106 = scmp.ne.s32.totalorder %s89, %s105
      %p107 = scmp.eq.s32.totalorder %s22, 0
      %p108 = por %p106, %p107
      %s109 = ssub.s32 %s24, %s31
      %p110 = scmp.eq.s32.totalorder %s109, 0
      %s112 = sadd.s32 %s111, 1
      %s113 = scalar_select %p110, %s111, %s112
      %p116 = pneg %p110
      %p117 = scmp.eq.s32.totalorder %s16, 1
      %p118 = por %p116, %p117
      %p119 = scmp.ne.s32.totalorder %s111, %s114
      %p120 = scmp.eq.s32.totalorder %s16, 0
      %p121 = por %p119, %p120
      %p122 = scmp.ne.s32.totalorder %s111, %s114
      %p123 = scmp.eq.s32.totalorder %s21, 1
      %p124 = por %p122, %p123
      %p125 = scmp.ne.s32.totalorder %s114, %s115
      %p126 = scmp.eq.s32.totalorder %s21, 0
      %p127 = por %p125, %p126
      %p128 = scmp.ne.s32.totalorder %s114, %s115
      %p129 = scmp.eq.s32.totalorder %s22, 1
      %p130 = por %p128, %p129
      %p132 = scmp.ne.s32.totalorder %s115, %s131
      %p133 = scmp.eq.s32.totalorder %s22, 0
      %p134 = por %p132, %p133
      %s135 = ssub.s32 %s23, %s35
      %s136 = ssub.s32 %s24, %s31
      %s137 = sor.u32 %s135, %s136
      %p138 = scmp.eq.s32.totalorder %s137, 0
      %s140 = sadd.s32 %s139, 1
      %s141 = scalar_select %p138, %s139, %s140
      %p144 = pneg %p138
      %p145 = scmp.eq.s32.totalorder %s16, 1
      %p146 = por %p144, %p145
      %p147 = scmp.ne.s32.totalorder %s139, %s142
      %p148 = scmp.eq.s32.totalorder %s16, 0
      %p149 = por %p147, %p148
      %p150 = scmp.ne.s32.totalorder %s139, %s142
      %p151 = scmp.eq.s32.totalorder %s21, 1
      %p152 = por %p150, %p151
      %p153 = scmp.ne.s32.totalorder %s142, %s143
      %p154 = scmp.eq.s32.totalorder %s21, 0
      %p155 = por %p153, %p154
      %p156 = scmp.ne.s32.totalorder %s142, %s143
      %p157 = scmp.eq.s32.totalorder %s22, 1
      %p158 = por %p156, %p157
      %p160 = scmp.ne.s32.totalorder %s143, %s159
      %p161 = scmp.eq.s32.totalorder %s22, 0
      %p162 = por %p160, %p161
      %p163 = scmp.le.s32.totalorder 1, %s16
      %p164 = scmp.lt.s32.totalorder %s16, 3
      %p165 = pnand %p163, %p164
      %p166 = pneg %p165
      // Predicated region
      $region9: #{tpu_custom_call.1} parent=5 // pred_check
        _
      $region10: #{tpu_custom_call.1} parent=5 // pred_check_branch
        %168 = sbr.rel (%p165) target = $region12
      $region11: #{tpu_custom_call.1} parent=5 // pred_region
        %s169 = ssub.s32 %s16, 1
        // Predicated region
        $region13: #{tpu_custom_call.1} parent=11 // pred_check
          %p170 = pneg %p49
        $region14: #{tpu_custom_call.1} parent=11 // pred_check_branch
          %172 = sbr.rel (%p170) target = $region16
        $region15: #{tpu_custom_call.1} parent=11 // pred_region
          _
        $region16: #{tpu_custom_call.1} parent=11 // pred_fallthru
          _
        // Predicated region
        $region17: #{tpu_custom_call.1} parent=11 // pred_check
          %p173 = pneg %p101
        $region18: #{tpu_custom_call.1} parent=11 // pred_check_branch
          %175 = sbr.rel (%p173) target = $region20
        $region19: #{tpu_custom_call.1} parent=11 // pred_region
          %s176 = smul.u32 2, %s26
          %p177 = scmp.lt.s32.totalorder %s176, 1
          %s178 = scalar_select %p177, %s176, 1
          %s179 = smul.addr %s178, 8
          %s180 = scalar_lea.vmem %s2, %s179
          %s181 = smul.u32 2, %s26
        $region20: #{tpu_custom_call.1} parent=11 // pred_fallthru
          _
        // Predicated region
        $region21: #{tpu_custom_call.1} parent=11 // pred_check
          %p182 = pneg %p127
        $region22: #{tpu_custom_call.1} parent=11 // pred_check_branch
          %184 = sbr.rel (%p182) target = $region24
        $region23: #{tpu_custom_call.1} parent=11 // pred_region
          %s185 = smul.u32 2, %s26
          %p186 = scmp.lt.s32.totalorder %s185, 1
          %s187 = scalar_select %p186, %s185, 1
          %s188 = smul.addr %s187, 8
          %s189 = scalar_lea.vmem %s3, %s188
          %s190 = smul.u32 2, %s26
        $region24: #{tpu_custom_call.1} parent=11 // pred_fallthru
          _
      $region12: #{tpu_custom_call.1} parent=5 // pred_fallthru
        _
      %p191 = scmp.lt.s32.totalorder %s16, 2
      // Predicated region
      $region25: #{tpu_custom_call.1} parent=5 // pred_check
        %p192 = pneg %p191
      $region26: #{tpu_custom_call.1} parent=5 // pred_check_branch
        %194 = sbr.rel (%p192) target = $region28
      $region27: #{tpu_custom_call.1} parent=5 // pred_region
        // Predicated region
        $region29: #{tpu_custom_call.1} parent=27 // pred_check
          %p195 = pneg %p69
        $region30: #{tpu_custom_call.1} parent=27 // pred_check_branch
          %197 = sbr.rel (%p195) target = $region32
        $region31: #{tpu_custom_call.1} parent=27 // pred_region
          %s198 = sand.u32 %s59, 1
          %s199 = scalar_lea.sflag [#allocation3], %s198
          %s200 = sand.u32 %s59, 1
          %s201 = smul.addr %s200, 16
          %s202 = scalar_lea.vmem [#allocation2], %s201
          %s204 = ssub.s32 256, 256
          %205 = vsyncadd %s199, %s204
          %s206 = smul.addr %s23, 2
          %s207 = smul.addr %s206, 128
          %s208 = scalar_lea.hbm %s1, %s207
          %s210 = sshll.u32 %s202, 4
          %s211 = int_to_ptr.vmem [resolvable:$true] %s210
          %213 = dma.hbm_to_vmem [thread:$0]  %s208, 256, %s211, %s199
        $region32: #{tpu_custom_call.1} parent=27 // pred_fallthru
          _
      $region28: #{tpu_custom_call.1} parent=5 // pred_fallthru
        _
      %p214 = scmp.le.s32.totalorder 1, %s16
      %p215 = scmp.lt.s32.totalorder %s16, 3
      %p216 = pnand %p214, %p215
      %p217 = pneg %p216
      // Predicated region
      $region33: #{tpu_custom_call.1} parent=5 // pred_check
        _
      $region34: #{tpu_custom_call.1} parent=5 // pred_check_branch
        %219 = sbr.rel (%p216) target = $region36
      $region35: #{tpu_custom_call.1} parent=5 // pred_region
        %s220 = ssub.s32 %s16, 1
        %s221 = sand.u32 %s62, 1
        %s222 = scalar_lea.sflag [#allocation3], %s221
        %s223 = sand.u32 %s62, 1
        %s224 = smul.addr %s223, 16
        %s225 = scalar_lea.vmem [#allocation2], %s224
        // Predicated region
        $region37: #{tpu_custom_call.1} parent=35 // pred_check
          %p226 = pneg %p75
        $region38: #{tpu_custom_call.1} parent=35 // pred_check_branch
          %228 = sbr.rel (%p226) target = $region40
        $region39: #{tpu_custom_call.1} parent=35 // pred_region
          %229 = dma.done %s222, 256
        $region40: #{tpu_custom_call.1} parent=35 // pred_fallthru
          _
        %p230 = pneg %p49
        %p231 = pneg %p46
        %s232 = sand.u32 %s62, 1
        %s233 = scalar_lea.sflag [#allocation3], %s232
        %s234 = sand.u32 %s62, 1
        %s235 = smul.addr %s234, 16
        %s236 = scalar_lea.vmem [#allocation2], %s235
        %p237 = pneg %p75
        %p238 = pneg %p72
        %s239 = smul.u32 2, %s26
        %p240 = scmp.lt.s32.totalorder %s239, 1
        %s241 = scalar_select %p240, %s239, 1
        %s242 = smul.addr %s241, 8
        %s243 = scalar_lea.vmem %s2, %s242
        %p244 = pneg %p101
        %p245 = pneg %p98
        %s246 = smul.u32 2, %s26
        %p247 = scmp.lt.s32.totalorder %s246, 1
        %s248 = scalar_select %p247, %s246, 1
        %s249 = smul.addr %s248, 8
        %s250 = scalar_lea.vmem %s3, %s249
        %p251 = pneg %p127
        %p252 = pneg %p124
        %p253 = pneg %p155
        %p254 = pneg %p152
        %s255 = sand.u32 %s142, 1
        %s256 = scalar_lea.sflag [#allocation4], %s255
        %s257 = sand.u32 %s142, 1
        %s258 = smul.addr %s257, 32
        %s259 = scalar_lea.vmem [#allocation5], %s258
        %s260 = smul.u32 2, %s26
        %p261 = scmp.lt.s32.totalorder %s260, 1
        %s262 = scalar_select %p261, %s260, 1
        %s263 = smul.addr %s262, 8
        %s264 = scalar_lea.vmem %s2, %s263
        %s265 = smul.u32 2, %s26
        %s266 = smul.u32 2, %s26
        %p267 = scmp.lt.s32.totalorder %s266, 1
        %s268 = scalar_select %p267, %s266, 1
        %s269 = smul.addr %s268, 8
        %s270 = scalar_lea.vmem %s3, %s269
        %s271 = smul.u32 2, %s26
        %s272 = smul.u32 2, %s26
        %v273 = vld [vmem:[%s225] sm:$0xff]
        %v274 = vld [vmem:[%s225 + $0x8] sm:$0xff]
        %v275 = vlaneseq
        %v276 = vand.u32 %v275, 127
        %v277 = vadd.s32 %v276, 128
        %v278 = vld [vmem:[%s0] sm:$0x3]
        %279 = vrot.lane.b32.xlu0 %v273, 17
        %v280 = vpop.permute.xlu0 %279
        %281 = vrot.lane.b32.xlu0 %v274, 17
        %v282 = vpop.permute.xlu0 %281
        %vm283 = vcmp.lt.s32.totalorder %v276, 17
        %v284 = vsel %vm283, %v280, %v282
        %v285 = vsel %vm283, %v282, %v280
        %vm286 = vcmp.ge.s32.totalorder %v276, 16
        %vm287 = vcmp.ge.s32.totalorder %v277, 16
        %vm288 = vcmp.ge.s32.totalorder %v278, 1
        %v289 = vsel %vm288, 1, 0
        %v290 = vlaneseq
        %v291 = vshrl.u32 %v290, 7
        %v292 = vsub.s32 0, %v291
        %v293 = vrot.slane %v289, %v292
        %v294 = vlaneseq
        %v295 = vshrl.u32 %v294, 7
        %v296 = vsub.s32 1, %v295
        %v297 = vrot.slane %v289, %v296
        %vm298 = vcmp.ne.s32.totalorder %v293, 0
        %vm299 = vcmp.ne.s32.totalorder %v297, 0
        %vm300 = vmand %vm286, %vm298
        %vm301 = vmand %vm287, %vm299
        %v302 = vsel %vm300, 1, 0
        %v303 = vsel %vm301, 1, 0
        %v304 = vlaneseq
        %v305 = vshrl.u32 %v304, 7
        %v306 = vsub.s32 0, %v305
        %v307 = vrot.slane %v302, %v306
        %v308 = vlaneseq
        %v309 = vshrl.u32 %v308, 7
        %v310 = vsub.s32 0, %v309
        %v311 = vrot.slane %v303, %v310
        %vm312 = vcmp.eq.s32.totalorder %v307, 1
        %vm313 = vcmp.eq.s32.totalorder %v311, 1
        %v314 = vsel %vm312, %v285, 0.0
        %v315 = vsel %vm313, %v284, 0.0
        %316 = vrot.lane.b32.xlu0 %v273, 16
        %v317 = vpop.permute.xlu0 %316
        %318 = vrot.lane.b32.xlu0 %v274, 16
        %v319 = vpop.permute.xlu0 %318
        %vm320 = vcmp.lt.s32.totalorder %v276, 16
        %v321 = vsel %vm320, %v317, %v319
        %v322 = vsel %vm320, %v319, %v317
        %v323 = vsel %vm286, 1, 0
        %v324 = vsel %vm287, 1, 0
        %vm325 = vcmp.eq.s32.totalorder %v323, 1
        %vm326 = vcmp.eq.s32.totalorder %v324, 1
        %v327 = vsel %vm325, %v322, 0.0
        %v328 = vsel %vm326, %v321, 0.0
        %329 = vrot.lane.b32.xlu0 %v273, 15
        %v330 = vpop.permute.xlu0 %329
        %331 = vrot.lane.b32.xlu0 %v274, 15
        %v332 = vpop.permute.xlu0 %331
        %vm333 = vcmp.lt.s32.totalorder %v276, 15
        %v334 = vsel %vm333, %v330, %v332
        %v335 = vsel %vm333, %v332, %v330
        %vm336 = vcmp.le.s32.totalorder %v278, 14
        %v337 = vsel %vm336, 1, 0
        %v338 = vlaneseq
        %v339 = vshrl.u32 %v338, 7
        %v340 = vsub.s32 0, %v339
        %v341 = vrot.slane %v337, %v340
        %v342 = vlaneseq
        %v343 = vshrl.u32 %v342, 7
        %v344 = vsub.s32 1, %v343
        %v345 = vrot.slane %v337, %v344
        %vm346 = vcmp.ne.s32.totalorder %v341, 0
        %vm347 = vcmp.ne.s32.totalorder %v345, 0
        %vm348 = vmand %vm286, %vm346
        %vm349 = vmand %vm287, %vm347
        %v350 = vsel %vm348, 1, 0
        %v351 = vsel %vm349, 1, 0
        %v352 = vlaneseq
        %v353 = vshrl.u32 %v352, 7
        %v354 = vsub.s32 0, %v353
        %v355 = vrot.slane %v350, %v354
        %v356 = vlaneseq
        %v357 = vshrl.u32 %v356, 7
        %v358 = vsub.s32 0, %v357
        %v359 = vrot.slane %v351, %v358
        %vm360 = vcmp.eq.s32.totalorder %v355, 1
        %vm361 = vcmp.eq.s32.totalorder %v359, 1
        %v362 = vsel %vm360, %v335, 0.0
        %v363 = vsel %vm361, %v334, 0.0
        %364 = vrot.lane.b32.xlu0 %v273, 1
        %v365 = vpop.permute.xlu0 %364
        %366 = vrot.lane.b32.xlu0 %v274, 1
        %v367 = vpop.permute.xlu0 %366
        %vm368 = vcmp.lt.s32.totalorder %v276, 1
        %v369 = vsel %vm368, %v365, %v367
        %v370 = vsel %vm368, %v367, %v365
        %vm371 = vcmp.eq.s32.totalorder %v293, 1
        %vm372 = vcmp.eq.s32.totalorder %v297, 1
        %v373 = vsel %vm371, %v370, 0.0
        %v374 = vsel %vm372, %v369, 0.0
        %375 = vrot.lane.b32.xlu0 %v273, 127
        %v376 = vpop.permute.xlu0 %375
        %377 = vrot.lane.b32.xlu0 %v274, 127
        %v378 = vpop.permute.xlu0 %377
        %vm379 = vcmp.lt.s32.totalorder %v276, 127
        %v380 = vsel %vm379, %v376, %v378
        %v381 = vsel %vm379, %v378, %v376
        %vm382 = vcmp.eq.s32.totalorder %v341, 1
        %vm383 = vcmp.eq.s32.totalorder %v345, 1
        %v384 = vsel %vm382, %v380, 0.0
        %v385 = vsel %vm383, %v381, 0.0
        %386 = vrot.lane.b32.xlu0 %v273, 113
        %v387 = vpop.permute.xlu0 %386
        %388 = vrot.lane.b32.xlu0 %v274, 113
        %v389 = vpop.permute.xlu0 %388
        %vm390 = vcmp.lt.s32.totalorder %v276, 113
        %v391 = vsel %vm390, %v387, %v389
        %v392 = vsel %vm390, %v389, %v387
        %vm393 = vcmp.lt.s32.totalorder %v276, 240
        %vm394 = vcmp.lt.s32.totalorder %v277, 240
        %vm395 = vmand %vm393, %vm298
        %vm396 = vmand %vm394, %vm299
        %v397 = vsel %vm395, 1, 0
        %v398 = vsel %vm396, 1, 0
        %v399 = vlaneseq
        %v400 = vshrl.u32 %v399, 7
        %v401 = vsub.s32 0, %v400
        %v402 = vrot.slane %v397, %v401
        %v403 = vlaneseq
        %v404 = vshrl.u32 %v403, 7
        %v405 = vsub.s32 0, %v404
        %v406 = vrot.slane %v398, %v405
        %vm407 = vcmp.eq.s32.totalorder %v402, 1
        %vm408 = vcmp.eq.s32.totalorder %v406, 1
        %v409 = vsel %vm407, %v391, 0.0
        %v410 = vsel %vm408, %v392, 0.0
        %411 = vrot.lane.b32.xlu0 %v273, 112
        %v412 = vpop.permute.xlu0 %411
        %413 = vrot.lane.b32.xlu0 %v274, 112
        %v414 = vpop.permute.xlu0 %413
        %vm415 = vcmp.lt.s32.totalorder %v276, 112
        %v416 = vsel %vm415, %v412, %v414
        %v417 = vsel %vm415, %v414, %v412
        %v418 = vsel %vm393, 1, 0
        %v419 = vsel %vm394, 1, 0
        %vm420 = vcmp.eq.s32.totalorder %v418, 1
        %vm421 = vcmp.eq.s32.totalorder %v419, 1
        %v422 = vsel %vm420, %v416, 0.0
        %v423 = vsel %vm421, %v417, 0.0
        %424 = vrot.lane.b32.xlu0 %v273, 111
        %v425 = vpop.permute.xlu0 %424
        %426 = vrot.lane.b32.xlu0 %v274, 111
        %v427 = vpop.permute.xlu0 %426
        %vm428 = vcmp.lt.s32.totalorder %v276, 111
        %v429 = vsel %vm428, %v425, %v427
        %v430 = vsel %vm428, %v427, %v425
        %vm431 = vmand %vm393, %vm346
        %vm432 = vmand %vm394, %vm347
        %v433 = vsel %vm431, 1, 0
        %v434 = vsel %vm432, 1, 0
        %v435 = vlaneseq
        %v436 = vshrl.u32 %v435, 7
        %v437 = vsub.s32 0, %v436
        %v438 = vrot.slane %v433, %v437
        %v439 = vlaneseq
        %v440 = vshrl.u32 %v439, 7
        %v441 = vsub.s32 0, %v440
        %v442 = vrot.slane %v434, %v441
        %vm443 = vcmp.eq.s32.totalorder %v438, 1
        %vm444 = vcmp.eq.s32.totalorder %v442, 1
        %v445 = vsel %vm443, %v429, 0.0
        %v446 = vsel %vm444, %v430, 0.0
        %v447 = vld [vmem:[%s264] sm:$0xff]
        %v448 = vld [vmem:[%s264 + $0x8] sm:$0xff]
        %v449 = vld [vmem:[%s270] sm:$0xff]
        %v450 = vld [vmem:[%s270 + $0x8] sm:$0xff]
        %452 = vset.pattern.permute.xlu0 0
        %453 = vperm.xlu0 %452, %v449
        %v454 = vpop.permute.xlu0 %453
        %457 = vset.pattern.permute.xlu0 0
        %458 = vperm.xlu0 %457, %v450
        %v459 = vpop.permute.xlu0 %458
        %vm461 = vcmask 588800
        %v463 = vsel %vm461, %v447, 0
        %v466 = vsel %vm461, %v448, 0
        %468 = vmatprep.subr.mxu0 0.0
        %469 = vmatpush1.msra.mxu0 0.0
        %470 = vmatprep.subr.mxu0 0.0
        %471 = vmatpush1.msra.mxu0 0.0
        %472 = vmatprep.subr.mxu0 0.0
        %473 = vmatpush1.msra.mxu0 0.0
        %474 = vmatprep.subr.mxu0 0.0
        %475 = vmatpush1.msra.mxu0 0.0
        %476 = vmatprep.subr.mxu0 0.0
        %477 = vmatpush1.msra.mxu0 0.0
        %478 = vmatprep.subr.mxu0 0.0
        %479 = vmatpush1.msra.mxu0 0.0
        %480 = vmatprep.subr.mxu0 0.0
        %481 = vmatpush1.msra.mxu0 0.0
        %482 = vmatprep.subr.mxu0 %v446
        %483 = vmatpush1.msra.mxu0 %v445
        %484 = vmatprep.subr.mxu0 %v423
        %485 = vmatpush1.msra.mxu0 %v422
        %486 = vmatprep.subr.mxu0 %v410
        %487 = vmatpush1.msra.mxu0 %v409
        %488 = vmatprep.subr.mxu0 %v385
        %489 = vmatpush1.msra.mxu0 %v384
        %490 = vmatprep.subr.mxu0 %v274
        %491 = vmatpush1.msra.mxu0 %v273
        %492 = vmatprep.subr.mxu0 %v374
        %493 = vmatpush1.msra.mxu0 %v373
        %494 = vmatprep.subr.mxu0 %v363
        %495 = vmatpush1.msra.mxu0 %v362
        %496 = vmatprep.subr.mxu0 %v328
        %497 = vmatpush1.msra.mxu0 %v327
        %498 = vmatprep.subr.mxu0 %v315
        %499 = vmatpush1.msra.mxu0 %v314
        %500 = vmatprep.subr.mxu0 0.0
        %501 = vmatpush2.msra.mxu0 0.0
        %502 = vmatprep.subr.mxu0 0.0
        %503 = vmatpush2.msra.mxu0 0.0
        %504 = vmatprep.subr.mxu0 0.0
        %505 = vmatpush2.msra.mxu0 0.0
        %506 = vmatprep.subr.mxu0 0.0
        %507 = vmatpush2.msra.mxu0 0.0
        %508 = vmatprep.subr.mxu0 0.0
        %509 = vmatpush2.msra.mxu0 0.0
        %510 = vmatprep.subr.mxu0 0.0
        %511 = vmatpush2.msra.mxu0 0.0
        %512 = vmatprep.subr.mxu0 0.0
        %513 = vmatpush2.msra.mxu0 0.0
        %514 = vmatprep.subr.mxu0 0.0
        %515 = vmatpush2.msra.mxu0 0.0
        %516 = vmatprep.subr.mxu0 0.0
        %517 = vmatpush2.msra.mxu0 0.0
        %518 = vmatprep.subr.mxu0 0.0
        %519 = vmatpush2.msra.mxu0 0.0
        %520 = vmatprep.subr.mxu0 0.0
        %521 = vmatpush2.msra.mxu0 0.0
        %522 = vmatprep.subr.mxu0 0.0
        %523 = vmatpush2.msra.mxu0 0.0
        %524 = vmatprep.subr.mxu0 0.0
        %525 = vmatpush2.msra.mxu0 0.0
        %526 = vmatprep.subr.mxu0 0.0
        %527 = vmatpush2.msra.mxu0 0.0
        %528 = vmatprep.subr.mxu0 0.0
        %529 = vmatpush2.msra.mxu0 0.0
        %530 = vmatprep.subr.mxu0 0.0
        %531 = vmatpush2.msra.mxu0 0.0
        %532 = vmatprep.mubr.f32.mxu0 0.0
        %533 = vmatmul.mubr.f32.gmra.mxu0 %v463
        %v534 = vpop.f32.mrf.mxu0
        %v535 = vadd.f32 %v454, %v534
        %v536 = vpop.f32.mrf.mxu0
        %v537 = vadd.f32 %v454, %v536
        %538 = vmatprep.mubr.f32.mxu0 0.0
        %539 = vmatmul.mubr.f32.gmra.mxu0 %v466
        %v540 = vpop.f32.mrf.mxu0
        %v541 = vadd.f32 %v459, %v540
        %v542 = vpop.f32.mrf.mxu0
        %v543 = vadd.f32 %v459, %v542
        %544 = vdwg.mxu0
        %v545 = vxor.u32 %v535, 2147483648
        %v546 = vxor.u32 %v537, 2147483648
        %v547 = vxor.u32 %v541, 2147483648
        %v548 = vxor.u32 %v543, 2147483648
        %v549 = vmul.f32 %v545, 1.442695
        %v550 = vpow.pop %v549
        %v551 = vmul.f32 %v546, 1.442695
        %v552 = vpow.pop %v551
        %v553 = vmul.f32 %v547, 1.442695
        %v554 = vpow.pop %v553
        %v555 = vmul.f32 %v548, 1.442695
        %v556 = vpow.pop %v555
        %v557 = vadd.f32 %v550, 1.0
        %v558 = vadd.f32 %v552, 1.0
        %v559 = vadd.f32 %v554, 1.0
        %v560 = vadd.f32 %v556, 1.0
        %v561 = vrcp.pop %v557
        %v562 = vmul.f32 1.0, %v561
        %v563 = vrcp.pop %v558
        %v564 = vmul.f32 1.0, %v563
        %v565 = vrcp.pop %v559
        %v566 = vmul.f32 1.0, %v565
        %v567 = vrcp.pop %v560
        %v568 = vmul.f32 1.0, %v567
        %v569 = vmul.f32 %v535, %v562
        %v570 = vmul.f32 %v537, %v564
        %v571 = vmul.f32 %v541, %v566
        %v572 = vmul.f32 %v543, %v568
        %573 = vst [vmem:[%s259] sm:$0xff] %v569
        %574 = vst [vmem:[%s259 + $0x8] sm:$0xff] %v570
        %575 = vst [vmem:[%s259 + $0x10] sm:$0xff] %v571
        %576 = vst [vmem:[%s259 + $0x18] sm:$0xff] %v572
        %s577 = sand.u32 %s142, 1
        %s578 = scalar_lea.sflag [#allocation4], %s577
        %s579 = sand.u32 %s142, 1
        %s580 = smul.addr %s579, 32
        %s581 = scalar_lea.vmem [#allocation5], %s580
        // Predicated region
        $region41: #{tpu_custom_call.1} parent=35 // pred_check
          %p582 = pneg %p152
        $region42: #{tpu_custom_call.1} parent=35 // pred_check_branch
          %584 = sbr.rel (%p582) target = $region44
        $region43: #{tpu_custom_call.1} parent=35 // pred_region
          %s585 = smul.u32 2, %s26
          %s587 = ssub.s32 512, 512
          %588 = vsyncadd %s578, %s587
          %s589 = smul.addr %s585, 2
          %s590 = smul.addr %s25, 4
          %s591 = sadd.s32 %s589, %s590
          %s592 = smul.addr %s591, 128
          %s593 = scalar_lea.hbm %s4, %s592
          %s594 = sshll.u32 %s581, 4
          %s595 = int_to_ptr.vmem [resolvable:$true] %s594
          %600 = dma.vmem_to_hbm [thread:$0]  %s595, 512, %s593, %s578, 256, 256, 16
        $region44: #{tpu_custom_call.1} parent=35 // pred_fallthru
          _
      $region36: #{tpu_custom_call.1} parent=5 // pred_fallthru
        _
      %p601 = scmp.le.s32.totalorder 2, %s16
      // Predicated region
      $region45: #{tpu_custom_call.1} parent=5 // pred_check
        %p602 = pneg %p601
      $region46: #{tpu_custom_call.1} parent=5 // pred_check_branch
        %604 = sbr.rel (%p602) target = $region48
      $region47: #{tpu_custom_call.1} parent=5 // pred_region
        %s605 = ssub.s32 %s16, 2
        // Predicated region
        $region49: #{tpu_custom_call.1} parent=47 // pred_check
          %p606 = pneg %p158
        $region50: #{tpu_custom_call.1} parent=47 // pred_check_branch
          %608 = sbr.rel (%p606) target = $region52
        $region51: #{tpu_custom_call.1} parent=47 // pred_region
          %s609 = sand.u32 %s143, 1
          %s610 = scalar_lea.sflag [#allocation4], %s609
          %s611 = sand.u32 %s143, 1
          %s612 = smul.addr %s611, 32
          %s613 = scalar_lea.vmem [#allocation5], %s612
          %614 = dma.done %s610, 512
        $region52: #{tpu_custom_call.1} parent=47 // pred_fallthru
          _
      $region48: #{tpu_custom_call.1} parent=5 // pred_fallthru
        _
    $region6: #{tpu_custom_call.1} parent=1 // loop_footer
      %s20 = sadd.s32 1, %s16
    $region7: #{tpu_custom_call.1} parent=1 // loop_footer_branch
      %15 = sbr.rel target = $region3
    $region8: #{tpu_custom_call.1} parent=1 // loop_exit
      _
    %615 = vsyncpa [#allocation3], 1
    %s616 = scalar_lea.sflag [#allocation3], 1
    %617 = vsyncpa %s616, 1
    %618 = vsyncpa [#allocation4], 1
    %s619 = scalar_lea.sflag [#allocation4], 1
    %620 = vsyncpa %s619, 1

</llo_original>
